<compile_context>
chip_gen: v5e
topology: v5e:2x2
jax: 0.10.0
libtpu: 0.0.40
codegen_flags: <defaults>
</compile_context>

<pallas_src>
import functools

import jax
import jax.numpy as jnp
import numpy as np
from jax.experimental import pallas as pl
from jax.experimental.pallas import tpu as pltpu

EMBED_DIM = 64
HIDDEN = 256
LANES = 128


def _round_up(x, m):
    return (x + m - 1) // m * m


def _ppo_eval_kernel(state_ref, action_ref, tw1_ref, b1_ref, w2_ref, b2_ref,
                     out_ref, *, action_dim):
    TB = state_ref.shape[0]
    state_dim = tw1_ref.shape[0]

    # ---- fused gather + layer 1: one_hot(state) @ (table @ [wa1|wc1]) ------
    st = state_ref[...]                                              # (TB, 1) i32
    st_iota = jax.lax.broadcasted_iota(jnp.int32, (TB, state_dim), 1)
    st_oh = (st_iota == st).astype(jnp.bfloat16)                     # (TB, S) bf16
    h = jnp.dot(st_oh, tw1_ref[...],
                preferred_element_type=jnp.float32) + b1_ref[...]    # (TB, 512)
    h = jnp.maximum(h, 0.0)                                          # shared ReLU

    # ---- fused layer 2 (block-diag): cols [0, A) = logits, col A = value ---
    out2 = jnp.dot(h.astype(jnp.bfloat16), w2_ref[...],
                   preferred_element_type=jnp.float32) + b2_ref[...]  # (TB, 128)

    col = jax.lax.broadcasted_iota(jnp.int32, (TB, LANES), 1)
    valid = col < action_dim

    # masked, numerically stable softmax over the first `action_dim` lanes
    logits = jnp.where(valid, out2, -1e30)
    m = jnp.max(logits, axis=-1, keepdims=True)
    z = logits - m
    e = jnp.exp(z)
    s = jnp.sum(e, axis=-1, keepdims=True)
    inv_s = pl.reciprocal(s, approx=True)
    inv_s = inv_s * (2.0 - s * inv_s)          # one Newton step -> ~exact divide
    probs = e * inv_s                          # 0 on pad lanes
    log_probs = z - jnp.log(s)

    # Categorical.log_prob(action), entropy, and the critic value
    act = action_ref[...]                                            # (TB, 1)
    act_oh = jnp.logical_and(col == act, valid)                      # (TB, 128)
    in_range = act < action_dim                                      # (TB, 1)
    logp = jnp.where(
        in_range,
        jnp.sum(jnp.where(act_oh, log_probs, 0.0), axis=-1, keepdims=True),
        -1e30)                                 # out-of-range action -> ~-inf
    ent = -jnp.sum(jnp.where(valid, probs * log_probs, 0.0), axis=-1,
                   keepdims=True)
    value = jnp.sum(jnp.where(col == action_dim, out2, 0.0), axis=-1,
                    keepdims=True)

    # ---- single lane-dense (TB, 256) slab: [probs | logp, value, ent, 0...] -
    out_ref[:, :LANES] = probs
    out_ref[:, LANES:] = (jnp.where(col == 0, logp, 0.0)
                          + jnp.where(col == 1, value, 0.0)
                          + jnp.where(col == 2, ent, 0.0))


def ppo_evaluate(packed, state, action, *, max_batch_tile=256):
    """JAX/Pallas equivalent of AugmentedActorCriticPPO.evaluate(state, action).

    Returns (action_logprobs, state_value, entropy, action_probs); the probs
    array stands in for the torch Categorical distribution object.
    """
    B = state.shape[0]
    action_dim = packed["action_dim"]
    tw1, b1, w2, b2 = packed["tw1"], packed["b1"], packed["w2"], packed["b2"]
    S, H2 = tw1.shape

    # Batch tile: multiple of 16 (bf16 sublane packing), capped for VMEM.
    TB = min(max_batch_tile, _round_up(max(B, 1), 16))
    B_pad = _round_up(max(B, 1), TB)
    grid = (B_pad // TB,)

    st = jnp.zeros((B_pad, 1), jnp.int32).at[:B, 0].set(state.astype(jnp.int32))
    ac = jnp.zeros((B_pad, 1), jnp.int32).at[:B, 0].set(action.astype(jnp.int32))

    kernel = functools.partial(_ppo_eval_kernel, action_dim=action_dim)

    vmem = pltpu.MemorySpace.VMEM
    flops = 2 * B_pad * (S * H2 + H2 * LANES) + 24 * B_pad * LANES
    transcendentals = B_pad * (LANES + 2)
    bytes_accessed = (st.size * 4 + ac.size * 4 + tw1.size * 2 + b1.size * 4
                      + w2.size * 2 + b2.size * 4 + B_pad * 2 * LANES * 4)

    out = pl.pallas_call(
        kernel,
        out_shape=jax.ShapeDtypeStruct((B_pad, 2 * LANES), jnp.float32),
        grid=grid,
        in_specs=[
            # batch-streamed per-tile inputs
            pl.BlockSpec((TB, 1), lambda i: (i, 0), memory_space=vmem),
            pl.BlockSpec((TB, 1), lambda i: (i, 0), memory_space=vmem),
            # weights: full blocks, VMEM-resident across all grid steps
            pl.BlockSpec((S, H2), lambda i: (0, 0), memory_space=vmem),
            pl.BlockSpec((1, H2), lambda i: (0, 0), memory_space=vmem),
            pl.BlockSpec((2 * HIDDEN, LANES), lambda i: (0, 0), memory_space=vmem),
            pl.BlockSpec((1, LANES), lambda i: (0, 0), memory_space=vmem),
        ],
        out_specs=pl.BlockSpec((TB, 2 * LANES), lambda i: (i, 0),
                               memory_space=vmem),
        compiler_params=pltpu.CompilerParams(
            dimension_semantics=("parallel",)),   # v7x: 2 TCs split the batch
        cost_estimate=pl.CostEstimate(flops=flops,
                                      transcendentals=transcendentals,
                                      bytes_accessed=bytes_accessed),
    )(st, ac, tw1, b1, w2, b2)

    logp = out[:B, LANES + 0]
    value = out[:B, LANES + 1]
    ent = out[:B, LANES + 2]
    probs = out[:B, :action_dim]
    return logp, value, ent, probs


def init_raw_params(key, state_dim, a_nvals, action_dim):
    """Deterministic synthetic parameters matching the module's __init__ shapes.

    Weights are stored as (in_features, out_features), i.e. transposed vs.
    PyTorch, so y = x @ W + b.
    """
    ks = jax.random.split(key, 10)
    combined_dim = EMBED_DIM + a_nvals

    def linear(kw, kb, fan_in, fan_out):
        bound = 1.0 / np.sqrt(fan_in)
        w = jax.random.uniform(kw, (fan_in, fan_out), jnp.float32, -bound, bound)
        b = jax.random.uniform(kb, (1, fan_out), jnp.float32, -bound, bound)
        return w, b

    embedding = jax.random.normal(ks[0], (state_dim, EMBED_DIM), jnp.float32)
    # Synthetic augmented model: log_q_a_s() -> (state_dim, a_nvals) log-probs.
    aug_logits = jax.random.normal(ks[1], (state_dim, a_nvals), jnp.float32)
    log_q_a_s = jax.nn.log_softmax(aug_logits, axis=-1)

    wa1, ba1 = linear(ks[2], ks[3], combined_dim, HIDDEN)
    wa2, ba2 = linear(ks[4], ks[5], HIDDEN, action_dim)
    wc1, bc1 = linear(ks[6], ks[7], combined_dim, HIDDEN)
    wc2, bc2 = linear(ks[8], ks[9], HIDDEN, 1)

    return dict(embedding=embedding, log_q_a_s=log_q_a_s,
                wa1=wa1, ba1=ba1, wa2=wa2, ba2=ba2,
                wc1=wc1, bc1=bc1, wc2=wc2, bc2=bc2)


def pack_params(raw, action_dim):
    """Pack raw (PyTorch-shaped) params into fused, folded, bf16 kernel weights."""
    state_dim = raw["embedding"].shape[0]
    a_nvals = raw["log_q_a_s"].shape[1]
    combined_dim = EMBED_DIM + a_nvals
    assert action_dim + 1 <= LANES

    # gather table [embedding | log_q_a_s]  (torch.no_grad -> stop_gradient)
    table = jnp.concatenate(
        [raw["embedding"], jax.lax.stop_gradient(raw["log_q_a_s"])],
        axis=1)                                                    # (S, combined)

    # fused first layer [wa1 | wc1] and its bias
    w1 = jnp.concatenate([raw["wa1"], raw["wc1"]], axis=1)         # (combined, 512)
    b1 = jnp.concatenate([raw["ba1"], raw["bc1"]], axis=1)         # (1, 512)

    # Fold gather into layer 1: TW1 = table @ w1 (exact f32), pad rows to x8.
    tw1 = jnp.dot(table, w1, precision=jax.lax.Precision.HIGHEST)  # (S, 512)
    S_pad = _round_up(state_dim, 8)
    tw1 = jnp.zeros((S_pad, 2 * HIDDEN), jnp.float32).at[:state_dim].set(tw1)

    # fused block-diagonal second layer: cols [0, A) actor logits, col A value
    w2 = jnp.zeros((2 * HIDDEN, LANES), jnp.float32)
    w2 = w2.at[:HIDDEN, :action_dim].set(raw["wa2"])
    w2 = w2.at[HIDDEN:, action_dim].set(raw["wc2"][:, 0])
    b2 = jnp.zeros((1, LANES), jnp.float32)
    b2 = b2.at[:, :action_dim].set(raw["ba2"])
    b2 = b2.at[:, action_dim].set(raw["bc2"][0, 0])

    return dict(tw1=tw1.astype(jnp.bfloat16), b1=b1,
                w2=w2.astype(jnp.bfloat16), b2=b2,
                action_dim=int(action_dim))


def _reference_evaluate(raw, state, action):
    emb = raw["embedding"][state]
    aug = raw["log_q_a_s"][state]
    combined = jnp.concatenate([emb, aug], axis=-1)
    h = jax.nn.relu(combined @ raw["wa1"] + raw["ba1"])
    logits = h @ raw["wa2"] + raw["ba2"]
    probs = jax.nn.softmax(logits, axis=-1)
    logp_all = jax.nn.log_softmax(logits, axis=-1)
    logp = jnp.take_along_axis(logp_all, action[:, None], axis=-1)[:, 0]
    ent = -jnp.sum(probs * logp_all, axis=-1)
    hc = jax.nn.relu(combined @ raw["wc1"] + raw["bc1"])
    value = (hc @ raw["wc2"] + raw["bc2"])[:, 0]
    return logp, value, ent, probs


if __name__ == "__main__":
    key = jax.random.PRNGKey(0)
    k_param, k_state, k_action = jax.random.split(key, 3)

    state_dim = 16     # number of discrete states (Embedding rows)
    a_nvals = 4        # augmented_model.a_nvals
    action_dim = 4
    batch = 8

    raw = init_raw_params(k_param, state_dim, a_nvals, action_dim)
    packed = pack_params(raw, action_dim)

    state = jax.random.randint(k_state, (batch,), 0, state_dim, dtype=jnp.int32)
    action = jax.random.randint(k_action, (batch,), 0, action_dim, dtype=jnp.int32)

    logp, value, ent, probs = ppo_evaluate(packed, state, action)
    jax.block_until_ready((logp, value, ent, probs))

    r_logp, r_value, r_ent, r_probs = _reference_evaluate(raw, state, action)
    # Tolerances account for bf16 matmul operands (f32 accumulation).
    np.testing.assert_allclose(np.asarray(logp), np.asarray(r_logp), rtol=2e-2, atol=2e-2)
    np.testing.assert_allclose(np.asarray(value), np.asarray(r_value), rtol=2e-2, atol=2e-2)
    np.testing.assert_allclose(np.asarray(ent), np.asarray(r_ent), rtol=2e-2, atol=2e-2)
    np.testing.assert_allclose(np.asarray(probs), np.asarray(r_probs), rtol=2e-2, atol=2e-2)

    print("KERNEL_OK")
</pallas_src>

<mosaic_0001>
module attributes {stable_mosaic.version = 11 : i64} {
  func.func @_ppo_eval_kernel(%arg0: i32, %arg1: memref<16x1xi32, #tpu.memory_space<vmem>>, %arg2: memref<16x1xi32, #tpu.memory_space<vmem>>, %arg3: memref<16x512xbf16, #tpu.memory_space<vmem>>, %arg4: memref<1x512xf32, #tpu.memory_space<vmem>>, %arg5: memref<512x128xbf16, #tpu.memory_space<vmem>>, %arg6: memref<1x128xf32, #tpu.memory_space<vmem>>, %arg7: memref<16x256xf32, #tpu.memory_space<vmem>>) attributes {dimension_semantics = [#tpu.dimension_semantics<parallel>], iteration_bounds = array<i64: 1>, scalar_prefetch = 0 : i64, scratch_operands = 0 : i64, tpu.core_type = #tpu.core_type<tc>, window_params = [{transform_indices = @transform_0, window_bounds = array<i64: 16, 1>}, {transform_indices = @transform_1, window_bounds = array<i64: 16, 1>}, {pipeline_mode = #tpu.pipeline_mode<synchronous>, transform_indices = @transform_2, window_bounds = array<i64: 16, 512>}, {pipeline_mode = #tpu.pipeline_mode<synchronous>, transform_indices = @transform_3, window_bounds = array<i64: 1, 512>}, {pipeline_mode = #tpu.pipeline_mode<synchronous>, transform_indices = @transform_4, window_bounds = array<i64: 512, 128>}, {pipeline_mode = #tpu.pipeline_mode<synchronous>, transform_indices = @transform_5, window_bounds = array<i64: 1, 128>}, {transform_indices = @transform_6, window_bounds = array<i64: 16, 256>}]} {
    %c0 = arith.constant 0 : index
    %c0_0 = arith.constant 0 : index
    %0 = vector.load %arg1[%c0, %c0_0] : memref<16x1xi32, #tpu.memory_space<vmem>>, vector<16x1xi32>
    %1 = tpu.iota {dimensions = array<i32: 1>} : vector<16x16xi32>
    %2 = vector.broadcast %0 : vector<16x1xi32> to vector<16x16xi32>
    %3 = arith.cmpi eq, %1, %2 : vector<16x16xi32>
    %4 = arith.extui %3 : vector<16x16xi1> to vector<16x16xi32>
    %5 = arith.sitofp %4 : vector<16x16xi32> to vector<16x16xf32>
    %6 = arith.truncf %5 : vector<16x16xf32> to vector<16x16xbf16>
    %c0_1 = arith.constant 0 : index
    %c0_2 = arith.constant 0 : index
    %7 = vector.load %arg3[%c0_1, %c0_2] : memref<16x512xbf16, #tpu.memory_space<vmem>>, vector<16x512xbf16>
    %cst = arith.constant dense<0.000000e+00> : vector<16x512xf32>
    %8 = tpu.matmul %6, %7, %cst {dimension_numbers = #tpu.dot_dimension_numbers<[1], [0], [0], [1], [0, 0, 1, 1], [], []>} : vector<16x16xbf16>, vector<16x512xbf16>, vector<16x512xf32> -> vector<16x512xf32>
    %c0_3 = arith.constant 0 : index
    %c0_4 = arith.constant 0 : index
    %9 = vector.load %arg4[%c0_3, %c0_4] : memref<1x512xf32, #tpu.memory_space<vmem>>, vector<1x512xf32>
    %10 = vector.broadcast %9 : vector<1x512xf32> to vector<16x512xf32>
    %11 = arith.addf %8, %10 : vector<16x512xf32>
    %cst_5 = arith.constant 0.000000e+00 : f32
    %12 = vector.broadcast %cst_5 : f32 to vector<16x512xf32>
    %13 = arith.maximumf %11, %12 : vector<16x512xf32>
    %14 = arith.truncf %13 : vector<16x512xf32> to vector<16x512xbf16>
    %c0_6 = arith.constant 0 : index
    %c0_7 = arith.constant 0 : index
    %15 = vector.load %arg5[%c0_6, %c0_7] : memref<512x128xbf16, #tpu.memory_space<vmem>>, vector<512x128xbf16>
    %cst_8 = arith.constant dense<0.000000e+00> : vector<16x128xf32>
    %16 = tpu.matmul %14, %15, %cst_8 {dimension_numbers = #tpu.dot_dimension_numbers<[1], [0], [0], [1], [0, 0, 1, 1], [], []>} : vector<16x512xbf16>, vector<512x128xbf16>, vector<16x128xf32> -> vector<16x128xf32>
    %c0_9 = arith.constant 0 : index
    %c0_10 = arith.constant 0 : index
    %17 = vector.load %arg6[%c0_9, %c0_10] : memref<1x128xf32, #tpu.memory_space<vmem>>, vector<1x128xf32>
    %18 = vector.broadcast %17 : vector<1x128xf32> to vector<16x128xf32>
    %19 = arith.addf %16, %18 : vector<16x128xf32>
    %20 = tpu.iota {dimensions = array<i32: 1>} : vector<16x128xi32>
    %c4_i32 = arith.constant 4 : i32
    %21 = vector.broadcast %c4_i32 : i32 to vector<16x128xi32>
    %22 = arith.cmpi slt, %20, %21 : vector<16x128xi32>
    %cst_11 = arith.constant -1.000000e+30 : f32
    %23 = vector.broadcast %cst_11 : f32 to vector<16x128xf32>
    %24 = arith.select %22, %19, %23 : vector<16x128xi1>, vector<16x128xf32>
    %cst_12 = arith.constant dense<0xFF800000> : vector<16xf32>
    %25 = vector.multi_reduction <maximumf>, %24, %cst_12 [1] : vector<16x128xf32> to vector<16xf32>
    %26 = vector.shape_cast %25 : vector<16xf32> to vector<16x1xf32>
    %27 = vector.broadcast %26 : vector<16x1xf32> to vector<16x128xf32>
    %28 = arith.subf %24, %27 : vector<16x128xf32>
    %29 = math.exp %28 : vector<16x128xf32>
    %cst_13 = arith.constant dense<0.000000e+00> : vector<16xf32>
    %30 = vector.multi_reduction <add>, %29, %cst_13 [1] : vector<16x128xf32> to vector<16xf32>
    %31 = vector.shape_cast %30 : vector<16xf32> to vector<16x1xf32>
    %32 = tpu.reciprocal %31 {approx = true} : vector<16x1xf32> -> vector<16x1xf32>
    %33 = arith.mulf %31, %32 : vector<16x1xf32>
    %cst_14 = arith.constant 2.000000e+00 : f32
    %34 = vector.broadcast %cst_14 : f32 to vector<16x1xf32>
    %35 = arith.subf %34, %33 : vector<16x1xf32>
    %36 = arith.mulf %32, %35 : vector<16x1xf32>
    %37 = vector.broadcast %36 : vector<16x1xf32> to vector<16x128xf32>
    %38 = arith.mulf %29, %37 : vector<16x128xf32>
    %39 = math.log %31 : vector<16x1xf32>
    %40 = vector.broadcast %39 : vector<16x1xf32> to vector<16x128xf32>
    %41 = arith.subf %28, %40 : vector<16x128xf32>
    %c0_15 = arith.constant 0 : index
    %c0_16 = arith.constant 0 : index
    %42 = vector.load %arg2[%c0_15, %c0_16] : memref<16x1xi32, #tpu.memory_space<vmem>>, vector<16x1xi32>
    %43 = vector.broadcast %42 : vector<16x1xi32> to vector<16x128xi32>
    %44 = arith.cmpi eq, %20, %43 : vector<16x128xi32>
    %45 = arith.andi %44, %22 : vector<16x128xi1>
    %c4_i32_17 = arith.constant 4 : i32
    %46 = vector.broadcast %c4_i32_17 : i32 to vector<16x1xi32>
    %47 = arith.cmpi slt, %42, %46 : vector<16x1xi32>
    %cst_18 = arith.constant 0.000000e+00 : f32
    %48 = vector.broadcast %cst_18 : f32 to vector<16x128xf32>
    %49 = arith.select %45, %41, %48 : vector<16x128xi1>, vector<16x128xf32>
    %cst_19 = arith.constant dense<0.000000e+00> : vector<16xf32>
    %50 = vector.multi_reduction <add>, %49, %cst_19 [1] : vector<16x128xf32> to vector<16xf32>
    %51 = vector.shape_cast %50 : vector<16xf32> to vector<16x1xf32>
    %cst_20 = arith.constant -1.000000e+30 : f32
    %52 = vector.broadcast %cst_20 : f32 to vector<16x1xf32>
    %53 = arith.select %47, %51, %52 : vector<16x1xi1>, vector<16x1xf32>
    %54 = arith.mulf %38, %41 : vector<16x128xf32>
    %cst_21 = arith.constant 0.000000e+00 : f32
    %55 = vector.broadcast %cst_21 : f32 to vector<16x128xf32>
    %56 = arith.select %22, %54, %55 : vector<16x128xi1>, vector<16x128xf32>
    %cst_22 = arith.constant dense<0.000000e+00> : vector<16xf32>
    %57 = vector.multi_reduction <add>, %56, %cst_22 [1] : vector<16x128xf32> to vector<16xf32>
    %58 = vector.shape_cast %57 : vector<16xf32> to vector<16x1xf32>
    %cst_23 = arith.constant 0.000000e+00 : f32
    %59 = vector.broadcast %cst_23 : f32 to vector<16x1xf32>
    %60 = arith.subf %59, %58 : vector<16x1xf32>
    %c4_i32_24 = arith.constant 4 : i32
    %61 = vector.broadcast %c4_i32_24 : i32 to vector<16x128xi32>
    %62 = arith.cmpi eq, %20, %61 : vector<16x128xi32>
    %cst_25 = arith.constant 0.000000e+00 : f32
    %63 = vector.broadcast %cst_25 : f32 to vector<16x128xf32>
    %64 = arith.select %62, %19, %63 : vector<16x128xi1>, vector<16x128xf32>
    %cst_26 = arith.constant dense<0.000000e+00> : vector<16xf32>
    %65 = vector.multi_reduction <add>, %64, %cst_26 [1] : vector<16x128xf32> to vector<16xf32>
    %66 = vector.shape_cast %65 : vector<16xf32> to vector<16x1xf32>
    %c0_27 = arith.constant 0 : index
    %c0_28 = arith.constant 0 : index
    %67 = vector.load %arg7[%c0_27, %c0_28] : memref<16x256xf32, #tpu.memory_space<vmem>>, vector<16x128xf32>
    tpu.vector_store %arg7[%c0_27, %c0_28], %38 {strides = array<i32>} : memref<16x256xf32, #tpu.memory_space<vmem>>, vector<16x128xf32>,
    %c0_i32 = arith.constant 0 : i32
    %68 = vector.broadcast %c0_i32 : i32 to vector<16x128xi32>
    %69 = arith.cmpi eq, %20, %68 : vector<16x128xi32>
    %cst_29 = arith.constant 0.000000e+00 : f32
    %70 = vector.shape_cast %53 : vector<16x1xf32> to vector<16x1xf32>
    %71 = vector.broadcast %70 : vector<16x1xf32> to vector<16x128xf32>
    %72 = vector.broadcast %cst_29 : f32 to vector<16x128xf32>
    %73 = arith.select %69, %71, %72 : vector<16x128xi1>, vector<16x128xf32>
    %c1_i32 = arith.constant 1 : i32
    %74 = vector.broadcast %c1_i32 : i32 to vector<16x128xi32>
    %75 = arith.cmpi eq, %20, %74 : vector<16x128xi32>
    %cst_30 = arith.constant 0.000000e+00 : f32
    %76 = vector.shape_cast %66 : vector<16x1xf32> to vector<16x1xf32>
    %77 = vector.broadcast %76 : vector<16x1xf32> to vector<16x128xf32>
    %78 = vector.broadcast %cst_30 : f32 to vector<16x128xf32>
    %79 = arith.select %75, %77, %78 : vector<16x128xi1>, vector<16x128xf32>
    %80 = arith.addf %73, %79 : vector<16x128xf32>
    %c2_i32 = arith.constant 2 : i32
    %81 = vector.broadcast %c2_i32 : i32 to vector<16x128xi32>
    %82 = arith.cmpi eq, %20, %81 : vector<16x128xi32>
    %cst_31 = arith.constant 0.000000e+00 : f32
    %83 = vector.shape_cast %60 : vector<16x1xf32> to vector<16x1xf32>
    %84 = vector.broadcast %83 : vector<16x1xf32> to vector<16x128xf32>
    %85 = vector.broadcast %cst_31 : f32 to vector<16x128xf32>
    %86 = arith.select %82, %84, %85 : vector<16x128xi1>, vector<16x128xf32>
    %87 = arith.addf %80, %86 : vector<16x128xf32>
    %c0_32 = arith.constant 0 : index
    %c128 = arith.constant 128 : index
    %88 = vector.load %arg7[%c0_32, %c128] : memref<16x256xf32, #tpu.memory_space<vmem>>, vector<16x128xf32>
    tpu.vector_store %arg7[%c0_32, %c128], %87 {strides = array<i32>} : memref<16x256xf32, #tpu.memory_space<vmem>>, vector<16x128xf32>,
    return
  }
  func.func @transform_0(%arg0: i32) -> (i32, i32) {
    %c0_i32 = arith.constant 0 : i32
    %c0_i32_0 = arith.constant 0 : i32
    return %arg0, %c0_i32 : i32, i32
  }
  func.func @transform_1(%arg0: i32) -> (i32, i32) {
    %c0_i32 = arith.constant 0 : i32
    %c0_i32_0 = arith.constant 0 : i32
    return %arg0, %c0_i32 : i32, i32
  }
  func.func @transform_2(%arg0: i32) -> (i32, i32) {
    %c0_i32 = arith.constant 0 : i32
    %c0_i32_0 = arith.constant 0 : i32
    %c0_i32_1 = arith.constant 0 : i32
    return %c0_i32, %c0_i32_0 : i32, i32
  }
  func.func @transform_3(%arg0: i32) -> (i32, i32) {
    %c0_i32 = arith.constant 0 : i32
    %c0_i32_0 = arith.constant 0 : i32
    %c0_i32_1 = arith.constant 0 : i32
    return %c0_i32, %c0_i32_0 : i32, i32
  }
  func.func @transform_4(%arg0: i32) -> (i32, i32) {
    %c0_i32 = arith.constant 0 : i32
    %c0_i32_0 = arith.constant 0 : i32
    %c0_i32_1 = arith.constant 0 : i32
    return %c0_i32, %c0_i32_0 : i32, i32
  }
  func.func @transform_5(%arg0: i32) -> (i32, i32) {
    %c0_i32 = arith.constant 0 : i32
    %c0_i32_0 = arith.constant 0 : i32
    %c0_i32_1 = arith.constant 0 : i32
    return %c0_i32, %c0_i32_0 : i32, i32
  }
  func.func @transform_6(%arg0: i32) -> (i32, i32) {
    %c0_i32 = arith.constant 0 : i32
    %c0_i32_0 = arith.constant 0 : i32
    return %arg0, %c0_i32 : i32, i32
  }
}

</mosaic_0001>

<llo_original>
// kernel: tpu_custom_call.1
$region0: #{tpu_custom_call.1}
  #allocation0 [shape = 'u32[]', space=smem, size = 0x4, offset = 0x4, fixed_abs, tag = 'smem constant byte address 0x4 - core index']
  #allocation1 [shape = 'u32[72,128]{1,0:T(1,128)}', space=vmem, size = 0x9000, scoped, tag = 'internal scratch']
  %s0 = inlined_call_operand.vmem [shape: s32[16,1], index: 0, kind: input, shape index: {}]
  %s1 = inlined_call_operand.vmem [shape: s32[16,1], index: 1, kind: input, shape index: {}]
  %s2 = inlined_call_operand.vmem [shape: bf16[16,512], index: 2, kind: input, shape index: {}]
  %s3 = inlined_call_operand.vmem [shape: f32[1,512], index: 3, kind: input, shape index: {}]
  %s4 = inlined_call_operand.hbm [shape: bf16[512,128], index: 4, kind: input, shape index: {}]
  %s5 = inlined_call_operand.vmem [shape: f32[1,128], index: 5, kind: input, shape index: {}]
  %s6 = inlined_call_operand.hbm [shape: f32[16,256], index: 6, kind: output, shape index: {}]
  %s7 = sld [smem:[#allocation0]]
  $region38: #{tpu_custom_call.1} parent=0
    _
  %s9 = ssub.s32 1, %s7
  %s10 = scalar_select 0, %s9, %s7
  $region1: #{tpu_custom_call.1} parent=0
    #allocation2 [shape = 'u8[131072]{0}', space=vmem, size = 0x20000, scoped, tag = 'input window, operand 4, single buffered']
    #allocation3 [shape = 's32[1]{0}', space=sflag, size = 0x4, scoped, tag = 'scoped memory for tpu_custom_call.1']
    #allocation4 [shape = 's32[1]{0}', space=sflag, size = 0x4, scoped, tag = 'scoped memory for tpu_custom_call.1']
    #allocation5 [shape = 'u8[16384]{0}', space=vmem, size = 0x4000, scoped, tag = 'output window, operand 0, single buffered']
    %11 = vsyncpa [#allocation3], 0
    %12 = vsyncpa [#allocation4], 0
    // Predicated region
    $region2: #{tpu_custom_call.1} parent=1 // pred_check
      _
    $region3: #{tpu_custom_call.1} parent=1 // pred_check_branch
      %14 = sbr.rel (0) target = $region5
    $region4: #{tpu_custom_call.1} parent=1 // pred_region
      _
    $region5: #{tpu_custom_call.1} parent=1 // pred_fallthru
      _
    // Predicated region
    $region6: #{tpu_custom_call.1} parent=1 // pred_check
      _
    $region7: #{tpu_custom_call.1} parent=1 // pred_check_branch
      %16 = sbr.rel (0) target = $region9
    $region8: #{tpu_custom_call.1} parent=1 // pred_region
      _
    $region9: #{tpu_custom_call.1} parent=1 // pred_fallthru
      _
    // Predicated region
    $region10: #{tpu_custom_call.1} parent=1 // pred_check
      _
    $region11: #{tpu_custom_call.1} parent=1 // pred_check_branch
      %18 = sbr.rel (0) target = $region13
    $region12: #{tpu_custom_call.1} parent=1 // pred_region
      _
    $region13: #{tpu_custom_call.1} parent=1 // pred_fallthru
      _
    // Predicated region
    $region14: #{tpu_custom_call.1} parent=1 // pred_check
      _
    $region15: #{tpu_custom_call.1} parent=1 // pred_check_branch
      %20 = sbr.rel (0) target = $region17
    $region16: #{tpu_custom_call.1} parent=1 // pred_region
      _
    $region17: #{tpu_custom_call.1} parent=1 // pred_fallthru
      _
    // Predicated region
    $region18: #{tpu_custom_call.1} parent=1 // pred_check
      _
    $region19: #{tpu_custom_call.1} parent=1 // pred_check_branch
      %22 = sbr.rel (0) target = $region21
    $region20: #{tpu_custom_call.1} parent=1 // pred_region
      %24 = vsyncadd [#allocation3], 0
      %s25 = sshll.u32 %s4, 4
      %s26 = int_to_ptr.hbm [resolvable:$true] %s25
      %s27 = sshll.u32 [#allocation2], 4
      %s28 = int_to_ptr.vmem [resolvable:$true] %s27
      %33 = dma.hbm_to_vmem [thread:$0]  %s26, 4096, %s28, [#allocation3], 64, 64, 4
    $region21: #{tpu_custom_call.1} parent=1 // pred_fallthru
      _
    // Predicated region
    $region22: #{tpu_custom_call.1} parent=1 // pred_check
      _
    $region23: #{tpu_custom_call.1} parent=1 // pred_check_branch
      %35 = sbr.rel (0) target = $region25
    $region24: #{tpu_custom_call.1} parent=1 // pred_region
      _
    $region25: #{tpu_custom_call.1} parent=1 // pred_fallthru
      _
    // Predicated region
    $region26: #{tpu_custom_call.1} parent=1 // pred_check
      _
    $region27: #{tpu_custom_call.1} parent=1 // pred_check_branch
      %37 = sbr.rel (0) target = $region29
    $region28: #{tpu_custom_call.1} parent=1 // pred_region
      %39 = dma.done [#allocation3], 4096
    $region29: #{tpu_custom_call.1} parent=1 // pred_fallthru
      _
    %v41 = vld [vmem:[%s0] sm:$0xff]
    %v42 = vld [vmem:[%s0 + $0x8] sm:$0xff]
    %v43 = vlaneseq
    %v44 = vand.u32 %v43, 127
    %45 = vset.pattern.permute.xlu0 0
    %46 = vperm.xlu0 %45, %v41
    %v47 = vpop.permute.xlu0 %46
    %48 = vset.pattern.permute.xlu0 0
    %49 = vperm.xlu0 %48, %v42
    %v50 = vpop.permute.xlu0 %49
    %vm51 = vcmp.eq.s32.totalorder %v44, %v47
    %vm52 = vcmp.eq.s32.totalorder %v44, %v50
    %v53 = vsel %vm51, 1, 0
    %v54 = vsel %vm52, 1, 0
    %v55 = vcvt.s32.f32 %v53
    %v56 = vcvt.s32.f32 %v54
    %v57 = vpack.c.bf16 %v56, %v55
    %v58 = vld [vmem:[%s2] sm:$0xff]
    %v59 = vld [vmem:[%s2 + $0x8] sm:$0xff]
    %v60 = vld [vmem:[%s2 + $0x10] sm:$0xff]
    %v61 = vld [vmem:[%s2 + $0x18] sm:$0xff]
    %v62 = vld [vmem:[%s3] sm:$0xf]
    %v64 = vperm.slane %v62, 0
    %v65 = vperm.slane %v62, 1
    %v66 = vperm.slane %v62, 2
    %v67 = vperm.slane %v62, 3
    %v76 = vunpack.c.l.b16 %v58
    %v77 = vunpack.c.h.b16 %v58
    %v78 = vunpack.c.l.b16 %v59
    %v79 = vunpack.c.h.b16 %v59
    %v80 = vunpack.c.l.b16 %v60
    %v81 = vunpack.c.h.b16 %v60
    %v82 = vunpack.c.l.b16 %v61
    %v83 = vunpack.c.h.b16 %v61
    %v84 = vpack.c.b16 %v80, %v76
    %v85 = vpack.c.b16 %v81, %v77
    %v86 = vpack.c.b16 %v82, %v78
    %v87 = vpack.c.b16 %v83, %v79
    %vm92 = vcmask 130048
    %v94 = vsel %vm92, %v57, 0
    %96 = vmatpush.bf16.msra.mxu0 0
    %97 = vmatpush.bf16.msra.mxu0 0
    %98 = vmatpush.bf16.msra.mxu0 0
    %99 = vmatpush.bf16.msra.mxu0 0
    %100 = vmatpush.bf16.msra.mxu0 0
    %101 = vmatpush.bf16.msra.mxu0 0
    %102 = vmatpush.bf16.msra.mxu0 0
    %103 = vmatpush.bf16.msra.mxu0 %v84
    %104 = vmatmul.bf16.gmra.mxu0 %v94
    %v105 = vpop.f32.mrf.mxu0
    %v106 = vadd.f32 %v64, %v105
    %v107 = vpop.f32.mrf.mxu0
    %v108 = vadd.f32 %v64, %v107
    %109 = vdwg.mxu0
    %110 = vmatpush.bf16.msra.mxu0 0
    %111 = vmatpush.bf16.msra.mxu0 0
    %112 = vmatpush.bf16.msra.mxu0 0
    %113 = vmatpush.bf16.msra.mxu0 0
    %114 = vmatpush.bf16.msra.mxu0 0
    %115 = vmatpush.bf16.msra.mxu0 0
    %116 = vmatpush.bf16.msra.mxu0 0
    %117 = vmatpush.bf16.msra.mxu0 %v85
    %118 = vmatmul.bf16.gmra.mxu0 %v94
    %v119 = vpop.f32.mrf.mxu0
    %v120 = vadd.f32 %v65, %v119
    %v121 = vpop.f32.mrf.mxu0
    %v122 = vadd.f32 %v65, %v121
    %123 = vdwg.mxu0
    %124 = vmatpush.bf16.msra.mxu0 0
    %125 = vmatpush.bf16.msra.mxu0 0
    %126 = vmatpush.bf16.msra.mxu0 0
    %127 = vmatpush.bf16.msra.mxu0 0
    %128 = vmatpush.bf16.msra.mxu0 0
    %129 = vmatpush.bf16.msra.mxu0 0
    %130 = vmatpush.bf16.msra.mxu0 0
    %131 = vmatpush.bf16.msra.mxu0 %v86
    %132 = vmatmul.bf16.gmra.mxu0 %v94
    %v133 = vpop.f32.mrf.mxu0
    %v134 = vadd.f32 %v66, %v133
    %v135 = vpop.f32.mrf.mxu0
    %v136 = vadd.f32 %v66, %v135
    %137 = vdwg.mxu0
    %138 = vmatpush.bf16.msra.mxu0 0
    %139 = vmatpush.bf16.msra.mxu0 0
    %140 = vmatpush.bf16.msra.mxu0 0
    %141 = vmatpush.bf16.msra.mxu0 0
    %142 = vmatpush.bf16.msra.mxu0 0
    %143 = vmatpush.bf16.msra.mxu0 0
    %144 = vmatpush.bf16.msra.mxu0 0
    %145 = vmatpush.bf16.msra.mxu0 %v87
    %146 = vmatmul.bf16.gmra.mxu0 %v94
    %v147 = vpop.f32.mrf.mxu0
    %v148 = vadd.f32 %v67, %v147
    %v149 = vpop.f32.mrf.mxu0
    %v150 = vadd.f32 %v67, %v149
    %151 = vdwg.mxu0
    %v152 = vmax.f32 %v106, 0.0
    %v153 = vmax.f32 %v120, 0.0
    %v154 = vmax.f32 %v134, 0.0
    %v155 = vmax.f32 %v148, 0.0
    %v156 = vmax.f32 %v108, 0.0
    %v157 = vmax.f32 %v122, 0.0
    %v158 = vmax.f32 %v136, 0.0
    %v159 = vmax.f32 %v150, 0.0
    %v160 = vpack.c.bf16 %v156, %v152
    %v161 = vpack.c.bf16 %v157, %v153
    %v162 = vpack.c.bf16 %v158, %v154
    %v163 = vpack.c.bf16 %v159, %v155
    %v164 = vld [vmem:[#allocation2] sm:$0xf]
    %v165 = vld [vmem:[#allocation2 + $0x4] sm:$0xf]
    %v166 = vld [vmem:[#allocation2 + $0x8] sm:$0xf]
    %v167 = vld [vmem:[#allocation2 + $0xc] sm:$0xf]
    %v168 = vld [vmem:[#allocation2 + $0x10] sm:$0xf]
    %v169 = vld [vmem:[#allocation2 + $0x14] sm:$0xf]
    %v170 = vld [vmem:[#allocation2 + $0x18] sm:$0xf]
    %v171 = vld [vmem:[#allocation2 + $0x1c] sm:$0xf]
    %v172 = vld [vmem:[#allocation2 + $0x20] sm:$0xf]
    %v173 = vld [vmem:[#allocation2 + $0x24] sm:$0xf]
    %v174 = vld [vmem:[#allocation2 + $0x28] sm:$0xf]
    %v175 = vld [vmem:[#allocation2 + $0x2c] sm:$0xf]
    %v176 = vld [vmem:[#allocation2 + $0x30] sm:$0xf]
    %v177 = vld [vmem:[#allocation2 + $0x34] sm:$0xf]
    %v178 = vld [vmem:[#allocation2 + $0x38] sm:$0xf]
    %v179 = vld [vmem:[#allocation2 + $0x3c] sm:$0xf]
    %v180 = vld [vmem:[#allocation2 + $0x40] sm:$0xf]
    %v181 = vld [vmem:[#allocation2 + $0x44] sm:$0xf]
    %v182 = vld [vmem:[#allocation2 + $0x48] sm:$0xf]
    %v183 = vld [vmem:[#allocation2 + $0x4c] sm:$0xf]
    %v184 = vld [vmem:[#allocation2 + $0x50] sm:$0xf]
    %v185 = vld [vmem:[#allocation2 + $0x54] sm:$0xf]
    %v186 = vld [vmem:[#allocation2 + $0x58] sm:$0xf]
    %v187 = vld [vmem:[#allocation2 + $0x5c] sm:$0xf]
    %v188 = vld [vmem:[#allocation2 + $0x60] sm:$0xf]
    %v189 = vld [vmem:[#allocation2 + $0x64] sm:$0xf]
    %v190 = vld [vmem:[#allocation2 + $0x68] sm:$0xf]
    %v191 = vld [vmem:[#allocation2 + $0x6c] sm:$0xf]
    %v192 = vld [vmem:[#allocation2 + $0x70] sm:$0xf]
    %v193 = vld [vmem:[#allocation2 + $0x74] sm:$0xf]
    %v194 = vld [vmem:[#allocation2 + $0x78] sm:$0xf]
    %v195 = vld [vmem:[#allocation2 + $0x7c] sm:$0xf]
    %v196 = vld [vmem:[#allocation2 + $0x80] sm:$0xf]
    %v197 = vld [vmem:[#allocation2 + $0x84] sm:$0xf]
    %v198 = vld [vmem:[#allocation2 + $0x88] sm:$0xf]
    %v199 = vld [vmem:[#allocation2 + $0x8c] sm:$0xf]
    %v200 = vld [vmem:[#allocation2 + $0x90] sm:$0xf]
    %v201 = vld [vmem:[#allocation2 + $0x94] sm:$0xf]
    %v202 = vld [vmem:[#allocation2 + $0x98] sm:$0xf]
    %v203 = vld [vmem:[#allocation2 + $0x9c] sm:$0xf]
    %v204 = vld [vmem:[#allocation2 + $0xa0] sm:$0xf]
    %v205 = vld [vmem:[#allocation2 + $0xa4] sm:$0xf]
    %v206 = vld [vmem:[#allocation2 + $0xa8] sm:$0xf]
    %v207 = vld [vmem:[#allocation2 + $0xac] sm:$0xf]
    %v208 = vld [vmem:[#allocation2 + $0xb0] sm:$0xf]
    %v209 = vld [vmem:[#allocation2 + $0xb4] sm:$0xf]
    %v210 = vld [vmem:[#allocation2 + $0xb8] sm:$0xf]
    %v211 = vld [vmem:[#allocation2 + $0xbc] sm:$0xf]
    %v212 = vld [vmem:[#allocation2 + $0xc0] sm:$0xf]
    %v213 = vld [vmem:[#allocation2 + $0xc4] sm:$0xf]
    %v214 = vld [vmem:[#allocation2 + $0xc8] sm:$0xf]
    %v215 = vld [vmem:[#allocation2 + $0xcc] sm:$0xf]
    %v216 = vld [vmem:[#allocation2 + $0xd0] sm:$0xf]
    %v217 = vld [vmem:[#allocation2 + $0xd4] sm:$0xf]
    %v218 = vld [vmem:[#allocation2 + $0xd8] sm:$0xf]
    %v219 = vld [vmem:[#allocation2 + $0xdc] sm:$0xf]
    %v220 = vld [vmem:[#allocation2 + $0xe0] sm:$0xf]
    %v221 = vld [vmem:[#allocation2 + $0xe4] sm:$0xf]
    %v222 = vld [vmem:[#allocation2 + $0xe8] sm:$0xf]
    %v223 = vld [vmem:[#allocation2 + $0xec] sm:$0xf]
    %v224 = vld [vmem:[#allocation2 + $0xf0] sm:$0xf]
    %v225 = vld [vmem:[#allocation2 + $0xf4] sm:$0xf]
    %v226 = vld [vmem:[#allocation2 + $0xf8] sm:$0xf]
    %v227 = vld [vmem:[#allocation2 + $0xfc] sm:$0xf]
    %v228 = vld [vmem:[%s5] sm:$0x1]
    %v230 = vperm.slane %v228, 0
    %v296 = vunpack.c.l.b16 %v164
    %v297 = vunpack.c.l.b16 %v165
    %v298 = vunpack.c.l.b16 %v166
    %v299 = vunpack.c.l.b16 %v167
    %v300 = vunpack.c.l.b16 %v168
    %v301 = vunpack.c.l.b16 %v169
    %v302 = vunpack.c.l.b16 %v170
    %v303 = vunpack.c.l.b16 %v171
    %v304 = vunpack.c.l.b16 %v172
    %v305 = vunpack.c.l.b16 %v173
    %v306 = vunpack.c.l.b16 %v174
    %v307 = vunpack.c.l.b16 %v175
    %v308 = vunpack.c.l.b16 %v176
    %v309 = vunpack.c.l.b16 %v177
    %v310 = vunpack.c.l.b16 %v178
    %v311 = vunpack.c.l.b16 %v179
    %v312 = vunpack.c.l.b16 %v180
    %v313 = vunpack.c.l.b16 %v181
    %v314 = vunpack.c.l.b16 %v182
    %v315 = vunpack.c.l.b16 %v183
    %v316 = vunpack.c.l.b16 %v184
    %v317 = vunpack.c.l.b16 %v185
    %v318 = vunpack.c.l.b16 %v186
    %v319 = vunpack.c.l.b16 %v187
    %v320 = vunpack.c.l.b16 %v188
    %v321 = vunpack.c.l.b16 %v189
    %v322 = vunpack.c.l.b16 %v190
    %v323 = vunpack.c.l.b16 %v191
    %v324 = vunpack.c.l.b16 %v192
    %v325 = vunpack.c.l.b16 %v193
    %v326 = vunpack.c.l.b16 %v194
    %v327 = vunpack.c.l.b16 %v195
    %v328 = vunpack.c.l.b16 %v196
    %v329 = vunpack.c.l.b16 %v197
    %v330 = vunpack.c.l.b16 %v198
    %v331 = vunpack.c.l.b16 %v199
    %v332 = vunpack.c.l.b16 %v200
    %v333 = vunpack.c.l.b16 %v201
    %v334 = vunpack.c.l.b16 %v202
    %v335 = vunpack.c.l.b16 %v203
    %v336 = vunpack.c.l.b16 %v204
    %v337 = vunpack.c.l.b16 %v205
    %v338 = vunpack.c.l.b16 %v206
    %v339 = vunpack.c.l.b16 %v207
    %v340 = vunpack.c.l.b16 %v208
    %v341 = vunpack.c.l.b16 %v209
    %v342 = vunpack.c.l.b16 %v210
    %v343 = vunpack.c.l.b16 %v211
    %v344 = vunpack.c.l.b16 %v212
    %v345 = vunpack.c.l.b16 %v213
    %v346 = vunpack.c.l.b16 %v214
    %v347 = vunpack.c.l.b16 %v215
    %v348 = vunpack.c.l.b16 %v216
    %v349 = vunpack.c.l.b16 %v217
    %v350 = vunpack.c.l.b16 %v218
    %v351 = vunpack.c.l.b16 %v219
    %v352 = vunpack.c.l.b16 %v220
    %v353 = vunpack.c.l.b16 %v221
    %v354 = vunpack.c.l.b16 %v222
    %v355 = vunpack.c.l.b16 %v223
    %v356 = vunpack.c.l.b16 %v224
    %v357 = vunpack.c.l.b16 %v225
    %v358 = vunpack.c.l.b16 %v226
    %v359 = vunpack.c.l.b16 %v227
    %v360 = vpack.c.b16 %v297, %v296
    %v361 = vpack.c.b16 %v299, %v298
    %v362 = vpack.c.b16 %v301, %v300
    %v363 = vpack.c.b16 %v303, %v302
    %v364 = vpack.c.b16 %v305, %v304
    %v365 = vpack.c.b16 %v307, %v306
    %v366 = vpack.c.b16 %v309, %v308
    %v367 = vpack.c.b16 %v311, %v310
    %v368 = vpack.c.b16 %v313, %v312
    %v369 = vpack.c.b16 %v315, %v314
    %v370 = vpack.c.b16 %v317, %v316
    %v371 = vpack.c.b16 %v319, %v318
    %v372 = vpack.c.b16 %v321, %v320
    %v373 = vpack.c.b16 %v323, %v322
    %v374 = vpack.c.b16 %v325, %v324
    %v375 = vpack.c.b16 %v327, %v326
    %v376 = vpack.c.b16 %v329, %v328
    %v377 = vpack.c.b16 %v331, %v330
    %v378 = vpack.c.b16 %v333, %v332
    %v379 = vpack.c.b16 %v335, %v334
    %v380 = vpack.c.b16 %v337, %v336
    %v381 = vpack.c.b16 %v339, %v338
    %v382 = vpack.c.b16 %v341, %v340
    %v383 = vpack.c.b16 %v343, %v342
    %v384 = vpack.c.b16 %v345, %v344
    %v385 = vpack.c.b16 %v347, %v346
    %v386 = vpack.c.b16 %v349, %v348
    %v387 = vpack.c.b16 %v351, %v350
    %v388 = vpack.c.b16 %v353, %v352
    %v389 = vpack.c.b16 %v355, %v354
    %v390 = vpack.c.b16 %v357, %v356
    %v391 = vpack.c.b16 %v359, %v358
    %424 = vmatpush.bf16.msra.mxu0 %v367
    %425 = vmatpush.bf16.msra.mxu0 %v366
    %426 = vmatpush.bf16.msra.mxu0 %v365
    %427 = vmatpush.bf16.msra.mxu0 %v364
    %428 = vmatpush.bf16.msra.mxu0 %v363
    %429 = vmatpush.bf16.msra.mxu0 %v362
    %430 = vmatpush.bf16.msra.mxu0 %v361
    %431 = vmatpush.bf16.msra.mxu0 %v360
    %432 = vmatmul.bf16.gmra.mxu0 %v160
    %v433 = vpop.f32.mrf.mxu0
    %v434 = vadd.f32 %v230, %v433
    %v435 = vpop.f32.mrf.mxu0
    %v436 = vadd.f32 %v230, %v435
    %437 = vdwg.mxu0
    %438 = vmatpush.bf16.msra.mxu0 %v375
    %439 = vmatpush.bf16.msra.mxu0 %v374
    %440 = vmatpush.bf16.msra.mxu0 %v373
    %441 = vmatpush.bf16.msra.mxu0 %v372
    %442 = vmatpush.bf16.msra.mxu0 %v371
    %443 = vmatpush.bf16.msra.mxu0 %v370
    %444 = vmatpush.bf16.msra.mxu0 %v369
    %445 = vmatpush.bf16.msra.mxu0 %v368
    %446 = vmatmul.bf16.gmra.mxu0 %v161
    %v447 = vpop.f32.mrf.mxu0
    %v448 = vadd.f32 %v434, %v447
    %v449 = vpop.f32.mrf.mxu0
    %v450 = vadd.f32 %v436, %v449
    %451 = vdwg.mxu0
    %452 = vmatpush.bf16.msra.mxu0 %v383
    %453 = vmatpush.bf16.msra.mxu0 %v382
    %454 = vmatpush.bf16.msra.mxu0 %v381
    %455 = vmatpush.bf16.msra.mxu0 %v380
    %456 = vmatpush.bf16.msra.mxu0 %v379
    %457 = vmatpush.bf16.msra.mxu0 %v378
    %458 = vmatpush.bf16.msra.mxu0 %v377
    %459 = vmatpush.bf16.msra.mxu0 %v376
    %460 = vmatmul.bf16.gmra.mxu0 %v162
    %v461 = vpop.f32.mrf.mxu0
    %v462 = vadd.f32 %v448, %v461
    %v463 = vpop.f32.mrf.mxu0
    %v464 = vadd.f32 %v450, %v463
    %465 = vdwg.mxu0
    %466 = vmatpush.bf16.msra.mxu0 %v391
    %467 = vmatpush.bf16.msra.mxu0 %v390
    %468 = vmatpush.bf16.msra.mxu0 %v389
    %469 = vmatpush.bf16.msra.mxu0 %v388
    %470 = vmatpush.bf16.msra.mxu0 %v387
    %471 = vmatpush.bf16.msra.mxu0 %v386
    %472 = vmatpush.bf16.msra.mxu0 %v385
    %473 = vmatpush.bf16.msra.mxu0 %v384
    %474 = vmatmul.bf16.gmra.mxu0 %v163
    %v475 = vpop.f32.mrf.mxu0
    %v476 = vadd.f32 %v462, %v475
    %v477 = vpop.f32.mrf.mxu0
    %v478 = vadd.f32 %v464, %v477
    %479 = vdwg.mxu0
    %vm480 = vcmp.lt.s32.totalorder %v44, 4
    %v481 = vsel %vm480, %v476, -1e+30
    %v482 = vsel %vm480, %v478, -1e+30
    %483 = vmax.xlane.f32.xlu0 %v481
    %v484 = vpop.xlane.xlu0 %483
    %485 = vmax.xlane.f32.xlu0 %v482
    %v486 = vpop.xlane.xlu0 %485
    %v487 = vsub.f32 %v481, %v484
    %v488 = vsub.f32 %v482, %v486
    %v489 = vmul.f32 %v487, 1.442695
    %v490 = vpow.pop %v489
    %v491 = vmul.f32 %v488, 1.442695
    %v492 = vpow.pop %v491
    %493 = vadd.xlane.f32.xlu0 %v490
    %v494 = vpop.xlane.xlu0 %493
    %495 = vadd.xlane.f32.xlu0 %v492
    %v496 = vpop.xlane.xlu0 %495
    %v497 = vrcp.pop %v494
    %v498 = vrcp.pop %v496
    %v499 = vmul.f32 %v494, %v497
    %v500 = vmul.f32 %v496, %v498
    %v501 = vsub.f32 2.0, %v499
    %v502 = vsub.f32 2.0, %v500
    %v503 = vmul.f32 %v497, %v501
    %v504 = vmul.f32 %v498, %v502
    %v505 = vmul.f32 %v490, %v503
    %v506 = vmul.f32 %v492, %v504
    %v507 = vlog2.pop %v494
    %v508 = vmul.f32 %v507, 0.6931472
    %v509 = vlog2.pop %v496
    %v510 = vmul.f32 %v509, 0.6931472
    %v511 = vsub.f32 %v487, %v508
    %v512 = vsub.f32 %v488, %v510
    %v513 = vld [vmem:[%s1] sm:$0xff]
    %v514 = vld [vmem:[%s1 + $0x8] sm:$0xff]
    %515 = vset.pattern.permute.xlu0 0
    %516 = vperm.xlu0 %515, %v513
    %v517 = vpop.permute.xlu0 %516
    %518 = vset.pattern.permute.xlu0 0
    %519 = vperm.xlu0 %518, %v514
    %v520 = vpop.permute.xlu0 %519
    %vm521 = vcmp.eq.s32.totalorder %v44, %v517
    %vm522 = vcmp.eq.s32.totalorder %v44, %v520
    %vm523 = vmand %vm521, %vm480
    %vm524 = vmand %vm522, %vm480
    %vm525 = vcmp.lt.s32.totalorder %v513, 4
    %vm526 = vcmp.lt.s32.totalorder %v514, 4
    %v527 = vsel %vm523, %v511, 0.0
    %v528 = vsel %vm524, %v512, 0.0
    %529 = vadd.xlane.f32.xlu0 %v527
    %v530 = vpop.xlane.xlu0 %529
    %531 = vadd.xlane.f32.xlu0 %v528
    %v532 = vpop.xlane.xlu0 %531
    %v533 = vsel %vm525, %v530, -1e+30
    %v534 = vsel %vm526, %v532, -1e+30
    %v535 = vmul.f32 %v505, %v511
    %v536 = vmul.f32 %v506, %v512
    %v537 = vsel %vm480, %v535, 0.0
    %v538 = vsel %vm480, %v536, 0.0
    %539 = vadd.xlane.f32.xlu0 %v537
    %v540 = vpop.xlane.xlu0 %539
    %541 = vadd.xlane.f32.xlu0 %v538
    %v542 = vpop.xlane.xlu0 %541
    %v543 = vsub.f32 0.0, %v540
    %v544 = vsub.f32 0.0, %v542
    %vm545 = vcmp.eq.s32.totalorder %v44, 4
    %v546 = vsel %vm545, %v476, 0.0
    %v547 = vsel %vm545, %v478, 0.0
    %548 = vadd.xlane.f32.xlu0 %v546
    %v549 = vpop.xlane.xlu0 %548
    %550 = vadd.xlane.f32.xlu0 %v547
    %v551 = vpop.xlane.xlu0 %550
    %552 = vst [vmem:[#allocation5] sm:$0xff] %v505
    %553 = vst [vmem:[#allocation5 + $0x10] sm:$0xff] %v506
    %vm554 = vcmp.eq.s32.totalorder %v44, 0
    %556 = vset.pattern.permute.xlu0 0
    %557 = vperm.xlu0 %556, %v533
    %v558 = vpop.permute.xlu0 %557
    %561 = vset.pattern.permute.xlu0 0
    %562 = vperm.xlu0 %561, %v534
    %v563 = vpop.permute.xlu0 %562
    %v565 = vsel %vm554, %v558, 0.0
    %v566 = vsel %vm554, %v563, 0.0
    %vm567 = vcmp.eq.s32.totalorder %v44, 1
    %v568 = vsel %vm567, %v549, 0.0
    %v569 = vsel %vm567, %v551, 0.0
    %v570 = vadd.f32 %v565, %v568
    %v571 = vadd.f32 %v566, %v569
    %vm572 = vcmp.eq.s32.totalorder %v44, 2
    %v573 = vsel %vm572, %v543, 0.0
    %v574 = vsel %vm572, %v544, 0.0
    %v575 = vadd.f32 %v570, %v573
    %v576 = vadd.f32 %v571, %v574
    %577 = vst [vmem:[#allocation5 + $0x8] sm:$0xff] %v575
    %578 = vst [vmem:[#allocation5 + $0x18] sm:$0xff] %v576
    // Predicated region
    $region30: #{tpu_custom_call.1} parent=1 // pred_check
      _
    $region31: #{tpu_custom_call.1} parent=1 // pred_check_branch
      %580 = sbr.rel (0) target = $region33
    $region32: #{tpu_custom_call.1} parent=1 // pred_region
      %582 = vsyncadd [#allocation4], 0
      %s583 = sshll.u32 [#allocation5], 4
      %s584 = int_to_ptr.vmem [resolvable:$true] %s583
      %s585 = sshll.u32 %s6, 4
      %s586 = int_to_ptr.hbm [resolvable:$true] %s585
      %591 = dma.vmem_to_hbm [thread:$0]  %s584, 512, %s586, [#allocation4], 256, 256, 16
    $region33: #{tpu_custom_call.1} parent=1 // pred_fallthru
      _
    // Predicated region
    $region34: #{tpu_custom_call.1} parent=1 // pred_check
      _
    $region35: #{tpu_custom_call.1} parent=1 // pred_check_branch
      %593 = sbr.rel (0) target = $region37
    $region36: #{tpu_custom_call.1} parent=1 // pred_region
      %595 = dma.done [#allocation4], 512
    $region37: #{tpu_custom_call.1} parent=1 // pred_fallthru
      _
    %596 = vsyncpa [#allocation3], 1
    %597 = vsyncpa [#allocation4], 1

</llo_original>
